<compile_context>
chip_gen: v7x
topology: tpu7x:2x2x1
jax: 0.10.0
libtpu: 0.0.40
codegen_flags: <defaults>
</compile_context>

<pallas_src>
import math

import jax
import jax.numpy as jnp
from jax import lax
from jax.experimental import pallas as pl
from jax.experimental.pallas import tpu as pltpu

_VMEM_LIMIT_BYTES = 48 * 1024 * 1024
_MASK_NEG = 1e30  # finite "minus infinity": keeps fully-masked rows NaN-free


def _pick_tile(n, preferred):
    """Largest tile <= preferred that evenly divides n (falls back to n)."""
    for t in (preferred, 512, 256, 128, 64, 32, 16, 8):
        if t <= n and n % t == 0:
            return t
    return n


# ---------------------------------------------------------------------------
# Linear projection kernel: y = x @ W + b, row-tiled, bf16 MXU / f32 accum.
# ---------------------------------------------------------------------------
def _linear_kernel(x_ref, w_ref, b_ref, o_ref):
    x = x_ref[...].astype(jnp.bfloat16)
    y = jnp.dot(x, w_ref[...], preferred_element_type=jnp.float32)
    o_ref[...] = (y + b_ref[...]).astype(o_ref.dtype)


def _linear(x2d, w, b, out_dtype):
    m, d_in = x2d.shape
    d_out = w.shape[1]
    tm = _pick_tile(m, 256)
    return pl.pallas_call(
        _linear_kernel,
        out_shape=jax.ShapeDtypeStruct((m, d_out), out_dtype),
        grid_spec=pltpu.PrefetchScalarGridSpec(
            num_scalar_prefetch=0,
            grid=(m // tm,),
            in_specs=[
                pl.BlockSpec((tm, d_in), lambda i: (i, 0)),
                pl.BlockSpec((d_in, d_out), lambda i: (0, 0)),  # resident block
                pl.BlockSpec((1, d_out), lambda i: (0, 0)),     # resident block
            ],
            out_specs=pl.BlockSpec((tm, d_out), lambda i: (i, 0)),
        ),
        compiler_params=pltpu.CompilerParams(
            dimension_semantics=("parallel",),
            vmem_limit_bytes=_VMEM_LIMIT_BYTES),
    )(x2d, w.astype(jnp.bfloat16), b.reshape(1, d_out).astype(jnp.float32))


# ---------------------------------------------------------------------------
# Flash-attention core: online softmax over kv tiles, heads folded into batch.
# ---------------------------------------------------------------------------
def _make_flash_kernel(use_mask, scale):
    def kernel(*refs):
        if use_mask:
            q_ref, k_ref, v_ref, mask_ref, o_ref, m_sc, l_sc, acc_sc = refs
        else:
            q_ref, k_ref, v_ref, o_ref, m_sc, l_sc, acc_sc = refs

        ki = pl.program_id(2)

        @pl.when(ki == 0)
        def _():
            m_sc[...] = jnp.full_like(m_sc, -jnp.inf)
            l_sc[...] = jnp.zeros_like(l_sc)
            acc_sc[...] = jnp.zeros_like(acc_sc)

        q = q_ref[0]  # (TQ, dk) bf16
        k = k_ref[0]  # (TKV, dk) bf16
        v = v_ref[0]  # (TKV, dk) bf16

        # scores = (q @ k^T) * scale, f32 accumulation on the MXU.
        s = lax.dot_general(q, k, (((1,), (1,)), ((), ())),
                            preferred_element_type=jnp.float32) * scale

        if use_mask:
            # Additive bias computed once per tile (not once per head).
            mask = mask_ref[0].astype(jnp.float32)        # (TQ, TKV) in {0,1}
            s = s + (mask - 1.0) * _MASK_NEG

        m_prev = m_sc[...]                                # (TQ, 1)
        m_new = jnp.maximum(m_prev, jnp.max(s, axis=-1, keepdims=True))
        alpha = jnp.exp(m_prev - m_new)
        p = jnp.exp(s - m_new)                            # (TQ, TKV) f32

        l_sc[...] = alpha * l_sc[...] + jnp.sum(p, axis=-1, keepdims=True)
        acc_sc[...] = alpha * acc_sc[...] + jnp.dot(
            p.astype(jnp.bfloat16), v, preferred_element_type=jnp.float32)
        m_sc[...] = m_new

        @pl.when(ki == pl.num_programs(2) - 1)
        def _():
            inv_l = pl.reciprocal(l_sc[...], approx=True)
            o_ref[0] = (acc_sc[...] * inv_l).astype(o_ref.dtype)

    return kernel


def _flash_attention(q4, k4, v4, mask, num_heads, d_k):
    """q4/k4/v4: (B*H, S, d_k) bf16.  mask: (B, S, S) bf16 {0,1} or None."""
    bh, s_len, dk = q4.shape
    tq = _pick_tile(s_len, 128)
    tkv = _pick_tile(s_len, 128)
    scale = 1.0 / math.sqrt(d_k)
    use_mask = mask is not None
    kernel = _make_flash_kernel(use_mask, scale)

    q_spec = pl.BlockSpec((1, tq, dk), lambda b, qi, ki: (b, qi, 0))
    kv_spec = pl.BlockSpec((1, tkv, dk), lambda b, qi, ki: (b, ki, 0))
    in_specs = [q_spec, kv_spec, kv_spec]
    args = [q4, k4, v4]
    if use_mask:
        in_specs.append(
            pl.BlockSpec((1, tq, tkv),
                         lambda b, qi, ki: (b // num_heads, qi, ki)))
        args.append(mask)

    return pl.pallas_call(
        kernel,
        out_shape=jax.ShapeDtypeStruct((bh, s_len, dk), jnp.bfloat16),
        grid_spec=pltpu.PrefetchScalarGridSpec(
            num_scalar_prefetch=0,
            grid=(bh, s_len // tq, s_len // tkv),
            in_specs=in_specs,
            out_specs=pl.BlockSpec((1, tq, dk), lambda b, qi, ki: (b, qi, 0)),
            scratch_shapes=[
                pltpu.VMEM((tq, 1), jnp.float32),    # running max m
                pltpu.VMEM((tq, 1), jnp.float32),    # running sum l
                pltpu.VMEM((tq, dk), jnp.float32),   # output accumulator
            ],
        ),
        compiler_params=pltpu.CompilerParams(
            dimension_semantics=("parallel", "parallel", "arbitrary"),
            vmem_limit_bytes=_VMEM_LIMIT_BYTES),
    )(*args)


# ---------------------------------------------------------------------------
# Module-level wrapper (matches PyTorch MultiHeadedAttention.forward).
# ---------------------------------------------------------------------------
def multi_headed_attention(query, key, value, params, num_heads, mask=None):
    """query/key/value: (B, S, D) float32.  params: Wq..bo (W as (D_in, D_out)).
    mask: (B, S, S) with nonzero = keep, or None."""
    B, S, D = query.shape
    assert D % num_heads == 0
    d_k = D // num_heads

    def split_heads(x2d):
        # (B*S, D) -> (B*H, S, d_k)
        return (x2d.reshape(B, S, num_heads, d_k)
                   .transpose(0, 2, 1, 3)
                   .reshape(B * num_heads, S, d_k))

    qp = _linear(query.reshape(B * S, D), params["Wq"], params["bq"], jnp.bfloat16)
    kp = _linear(key.reshape(B * S, D), params["Wk"], params["bk"], jnp.bfloat16)
    vp = _linear(value.reshape(B * S, D), params["Wv"], params["bv"], jnp.bfloat16)

    mask_bf16 = None if mask is None else (mask != 0).astype(jnp.bfloat16)

    ctx = _flash_attention(split_heads(qp), split_heads(kp), split_heads(vp),
                           mask_bf16, num_heads, d_k)

    # (B*H, S, d_k) -> (B*S, D) -> output projection.
    ctx2d = (ctx.reshape(B, num_heads, S, d_k)
                .transpose(0, 2, 1, 3)
                .reshape(B * S, D))
    out = _linear(ctx2d, params["Wo"], params["bo"], jnp.float32)
    return out.reshape(B, S, D)


# ---------------------------------------------------------------------------
# Init + pure-JAX reference + self-test.
# ---------------------------------------------------------------------------
def _init_linear(key, d_in, d_out):
    # PyTorch nn.Linear default init: U(-1/sqrt(in), 1/sqrt(in)) for W and b.
    k1, k2 = jax.random.split(key)
    bound = 1.0 / math.sqrt(d_in)
    w = jax.random.uniform(k1, (d_out, d_in), jnp.float32, -bound, bound)
    b = jax.random.uniform(k2, (d_out,), jnp.float32, -bound, bound)
    return w.T, b  # (in, out) so y = x @ W + b


def _reference(query, key, value, params, num_heads, mask=None):
    B, S, D = query.shape
    d_k = D // num_heads

    def proj(x, W, b):
        y = x @ W + b
        return y.reshape(B, S, num_heads, d_k).transpose(0, 2, 1, 3)

    q = proj(query, params["Wq"], params["bq"])
    k = proj(key, params["Wk"], params["bk"])
    v = proj(value, params["Wv"], params["bv"])
    scores = jnp.einsum("bhqd,bhkd->bhqk", q, k) / math.sqrt(d_k)
    if mask is not None:
        scores = jnp.where(mask[:, None, :, :] == 0, -jnp.inf, scores)
    p = jax.nn.softmax(scores, axis=-1)
    x = jnp.einsum("bhqk,bhkd->bhqd", p, v)
    x = x.transpose(0, 2, 1, 3).reshape(B, S, D)
    return x @ params["Wo"] + params["bo"]


if __name__ == "__main__":
    B, S, D, H = 2, 8, 32, 4

    root = jax.random.PRNGKey(0)
    kq, kk, kv, ko, kx1, kx2, kx3, km = jax.random.split(root, 8)

    Wq, bq = _init_linear(kq, D, D)
    Wk, bk = _init_linear(kk, D, D)
    Wv, bv = _init_linear(kv, D, D)
    Wo, bo = _init_linear(ko, D, D)
    params = dict(Wq=Wq, bq=bq, Wk=Wk, bk=bk, Wv=Wv, bv=bv, Wo=Wo, bo=bo)

    query = jax.random.normal(kx1, (B, S, D), jnp.float32)
    key = jax.random.normal(kx2, (B, S, D), jnp.float32)
    value = jax.random.normal(kx3, (B, S, D), jnp.float32)
    # Causal mask exercises the masked_fill path (1 = keep, 0 = mask).
    mask = jnp.tril(jnp.ones((S, S), jnp.int32))[None].repeat(B, axis=0)

    out = jax.block_until_ready(
        multi_headed_attention(query, key, value, params, H, mask=mask))
    ref = _reference(query, key, value, params, H, mask=mask)
    assert jnp.allclose(out, ref, atol=3e-2, rtol=3e-2), "mismatch vs reference"

    # mask=None path (no mask tensor is DMA'd at all).
    out2 = jax.block_until_ready(
        multi_headed_attention(query, key, value, params, H, mask=None))
    ref2 = _reference(query, key, value, params, H, mask=None)
    assert jnp.allclose(out2, ref2, atol=3e-2, rtol=3e-2), "mismatch (no mask)"

    print("KERNEL_OK")
</pallas_src>

<mosaic_0001>
module attributes {stable_mosaic.version = 11 : i64} {
  func.func @_linear_kernel(%arg0: i32, %arg1: memref<16x32xf32, #tpu.memory_space<vmem>>, %arg2: memref<32x32xbf16, #tpu.memory_space<vmem>>, %arg3: memref<1x32xf32, #tpu.memory_space<vmem>>, %arg4: memref<16x32xbf16, #tpu.memory_space<vmem>>) attributes {dimension_semantics = [#tpu.dimension_semantics<parallel>], iteration_bounds = array<i64: 1>, scalar_prefetch = 0 : i64, scratch_operands = 0 : i64, tpu.core_type = #tpu.core_type<tc>, window_params = [{transform_indices = @transform_0, window_bounds = array<i64: 16, 32>}, {pipeline_mode = #tpu.pipeline_mode<synchronous>, transform_indices = @transform_1, window_bounds = array<i64: 32, 32>}, {pipeline_mode = #tpu.pipeline_mode<synchronous>, transform_indices = @transform_2, window_bounds = array<i64: 1, 32>}, {transform_indices = @transform_3, window_bounds = array<i64: 16, 32>}]} {
    %c0 = arith.constant 0 : index
    %c0_0 = arith.constant 0 : index
    %0 = vector.load %arg1[%c0, %c0_0] : memref<16x32xf32, #tpu.memory_space<vmem>>, vector<16x32xf32>
    %1 = arith.truncf %0 : vector<16x32xf32> to vector<16x32xbf16>
    %c0_1 = arith.constant 0 : index
    %c0_2 = arith.constant 0 : index
    %2 = vector.load %arg2[%c0_1, %c0_2] : memref<32x32xbf16, #tpu.memory_space<vmem>>, vector<32x32xbf16>
    %cst = arith.constant dense<0.000000e+00> : vector<16x32xf32>
    %3 = tpu.matmul %1, %2, %cst {dimension_numbers = #tpu.dot_dimension_numbers<[1], [0], [0], [1], [0, 0, 1, 1], [], []>} : vector<16x32xbf16>, vector<32x32xbf16>, vector<16x32xf32> -> vector<16x32xf32>
    %c0_3 = arith.constant 0 : index
    %c0_4 = arith.constant 0 : index
    %4 = vector.load %arg3[%c0_3, %c0_4] : memref<1x32xf32, #tpu.memory_space<vmem>>, vector<1x32xf32>
    %5 = vector.broadcast %4 : vector<1x32xf32> to vector<16x32xf32>
    %6 = arith.addf %3, %5 : vector<16x32xf32>
    %7 = arith.truncf %6 : vector<16x32xf32> to vector<16x32xbf16>
    %c0_5 = arith.constant 0 : index
    %c0_6 = arith.constant 0 : index
    %8 = vector.load %arg4[%c0_5, %c0_6] : memref<16x32xbf16, #tpu.memory_space<vmem>>, vector<16x32xbf16>
    tpu.vector_store %arg4[%c0_5, %c0_6], %7 {strides = array<i32>} : memref<16x32xbf16, #tpu.memory_space<vmem>>, vector<16x32xbf16>,
    return
  }
  func.func @transform_0(%arg0: i32) -> (i32, i32) {
    %c0_i32 = arith.constant 0 : i32
    %c0_i32_0 = arith.constant 0 : i32
    return %arg0, %c0_i32 : i32, i32
  }
  func.func @transform_1(%arg0: i32) -> (i32, i32) {
    %c0_i32 = arith.constant 0 : i32
    %c0_i32_0 = arith.constant 0 : i32
    %c0_i32_1 = arith.constant 0 : i32
    return %c0_i32, %c0_i32_0 : i32, i32
  }
  func.func @transform_2(%arg0: i32) -> (i32, i32) {
    %c0_i32 = arith.constant 0 : i32
    %c0_i32_0 = arith.constant 0 : i32
    %c0_i32_1 = arith.constant 0 : i32
    return %c0_i32, %c0_i32_0 : i32, i32
  }
  func.func @transform_3(%arg0: i32) -> (i32, i32) {
    %c0_i32 = arith.constant 0 : i32
    %c0_i32_0 = arith.constant 0 : i32
    return %arg0, %c0_i32 : i32, i32
  }
}

</mosaic_0001>

<llo_original>
// kernel: tpu_custom_call.1
$region0: #{tpu_custom_call.1}
  #allocation0 [shape = 'u32[]', space=smem, size = 0x4, offset = 0x4, fixed_abs, tag = 'smem constant byte address 0x4 - core index']
  #allocation1 [shape = 'u32[144,128]{1,0:T(1,128)}', space=vmem, size = 0x12000, scoped, tag = 'internal scratch']
  %s0 = inlined_call_operand.hbm [shape: f32[16,32], index: 0, kind: input, shape index: {}]
  %s1 = inlined_call_operand.hbm [shape: bf16[32,32], index: 1, kind: input, shape index: {}]
  %s2 = inlined_call_operand.vmem [shape: f32[1,32], index: 2, kind: input, shape index: {}]
  %s3 = inlined_call_operand.hbm [shape: bf16[16,32], index: 3, kind: output, shape index: {}]
  %s4 = sld [smem:[#allocation0]]
  $region30: #{tpu_custom_call.1} parent=0
    _
  %s6 = ssub.s32 1, %s4
  %s7 = scalar_select 0, %s6, %s4
  $region1: #{tpu_custom_call.1} parent=0
    #allocation2 [shape = 'u8[8192]{0}', space=vmem, size = 0x2000, scoped, tag = 'input window, operand 0, single buffered']
    #allocation3 [shape = 's32[1]{0}', space=sflag, size = 0x4, scoped, tag = 'scoped memory for tpu_custom_call.1']
    #allocation4 [shape = 's32[1]{0}', space=sflag, size = 0x4, scoped, tag = 'scoped memory for tpu_custom_call.1']
    #allocation5 [shape = 'u8[8192]{0}', space=vmem, size = 0x2000, scoped, tag = 'input window, operand 1, single buffered']
    #allocation6 [shape = 's32[1]{0}', space=sflag, size = 0x4, scoped, tag = 'scoped memory for tpu_custom_call.1']
    #allocation7 [shape = 'u8[4096]{0}', space=vmem, size = 0x1000, scoped, tag = 'output window, operand 0, single buffered']
    %8 = vsyncpa [#allocation3], 0
    %9 = vsyncpa [#allocation6], 0
    %10 = vsyncpa [#allocation4], 0
    // Predicated region
    $region2: #{tpu_custom_call.1} parent=1 // pred_check
      _
    $region3: #{tpu_custom_call.1} parent=1 // pred_check_branch
      %12 = sbr.rel (0) target = $region5
    $region4: #{tpu_custom_call.1} parent=1 // pred_region
      %s14 = ssub.s32 256, 256
      %15 = vsyncadd [#allocation3], %s14
      %s16 = sshll.u32 [#allocation2], 4
      %s17 = int_to_ptr.vmem [resolvable:$true] %s16
      %22 = dma.hbm_to_vmem [thread:$0]  %s0, 256, %s17, [#allocation3], 128, 128, 8
    $region5: #{tpu_custom_call.1} parent=1 // pred_fallthru
      _
    // Predicated region
    $region6: #{tpu_custom_call.1} parent=1 // pred_check
      _
    $region7: #{tpu_custom_call.1} parent=1 // pred_check_branch
      %24 = sbr.rel (0) target = $region9
    $region8: #{tpu_custom_call.1} parent=1 // pred_region
      %s26 = ssub.s32 256, 256
      %27 = vsyncadd [#allocation6], %s26
      %s28 = sshll.u32 [#allocation5], 4
      %s29 = int_to_ptr.vmem [resolvable:$true] %s28
      %34 = dma.hbm_to_vmem [thread:$0]  %s1, 256, %s29, [#allocation6], 64, 64, 4
    $region9: #{tpu_custom_call.1} parent=1 // pred_fallthru
      _
    // Predicated region
    $region10: #{tpu_custom_call.1} parent=1 // pred_check
      _
    $region11: #{tpu_custom_call.1} parent=1 // pred_check_branch
      %36 = sbr.rel (0) target = $region13
    $region12: #{tpu_custom_call.1} parent=1 // pred_region
      _
    $region13: #{tpu_custom_call.1} parent=1 // pred_fallthru
      _
    // Predicated region
    $region14: #{tpu_custom_call.1} parent=1 // pred_check
      _
    $region15: #{tpu_custom_call.1} parent=1 // pred_check_branch
      %38 = sbr.rel (0) target = $region17
    $region16: #{tpu_custom_call.1} parent=1 // pred_region
      %39 = dma.done [#allocation3], 256
    $region17: #{tpu_custom_call.1} parent=1 // pred_fallthru
      _
    // Predicated region
    $region18: #{tpu_custom_call.1} parent=1 // pred_check
      _
    $region19: #{tpu_custom_call.1} parent=1 // pred_check_branch
      %41 = sbr.rel (0) target = $region21
    $region20: #{tpu_custom_call.1} parent=1 // pred_region
      %42 = dma.done [#allocation6], 256
    $region21: #{tpu_custom_call.1} parent=1 // pred_fallthru
      _
    %v44 = vld [vmem:[#allocation2] sm:$0xff]
    %v45 = vld [vmem:[#allocation2 + $0x8] sm:$0xff]
    %v46 = vpack.c.bf16 %v45, %v44
    %v47 = vld [vmem:[#allocation5] sm:$0xf]
    %v48 = vld [vmem:[#allocation5 + $0x4] sm:$0xf]
    %v49 = vld [vmem:[#allocation5 + $0x8] sm:$0xf]
    %v50 = vld [vmem:[#allocation5 + $0xc] sm:$0xf]
    %v51 = vld [vmem:[%s2] sm:$0x1]
    %v53 = vlaneseq
    %v54 = vshrl.u32 %v53, 7
    %v55 = vsub.s32 0, %v54
    %v56 = vrot.slane %v51, %v55
    %v62 = vunpack.c.l.b16 %v47
    %v63 = vunpack.c.l.b16 %v48
    %v64 = vunpack.c.l.b16 %v49
    %v65 = vunpack.c.l.b16 %v50
    %v66 = vpack.c.b16 %v63, %v62
    %v67 = vpack.c.b16 %v65, %v64
    %vm70 = vcmask 261120
    %v72 = vsel %vm70, %v46, 0
    %74 = vmatprep.subr.bf16.mxu0 0
    %75 = vmatpush1.bf16.msra.mxu0 %v66
    %76 = vmatprep.subr.bf16.mxu0 0
    %77 = vmatpush1.bf16.msra.mxu0 %v67
    %78 = vmatprep.subr.bf16.mxu0 0
    %79 = vmatpush1.bf16.msra.mxu0 0
    %80 = vmatprep.subr.bf16.mxu0 0
    %81 = vmatpush1.bf16.msra.mxu0 0
    %82 = vmatprep.subr.bf16.mxu0 0
    %83 = vmatpush1.bf16.msra.mxu0 0
    %84 = vmatprep.subr.bf16.mxu0 0
    %85 = vmatpush1.bf16.msra.mxu0 0
    %86 = vmatprep.subr.bf16.mxu0 0
    %87 = vmatpush1.bf16.msra.mxu0 0
    %88 = vmatprep.subr.bf16.mxu0 0
    %89 = vmatpush1.bf16.msra.mxu0 0
    %90 = vmatprep.subr.bf16.mxu0 0
    %91 = vmatpush1.bf16.msra.mxu0 0
    %92 = vmatprep.subr.bf16.mxu0 0
    %93 = vmatpush1.bf16.msra.mxu0 0
    %94 = vmatprep.subr.bf16.mxu0 0
    %95 = vmatpush1.bf16.msra.mxu0 0
    %96 = vmatprep.subr.bf16.mxu0 0
    %97 = vmatpush1.bf16.msra.mxu0 0
    %98 = vmatprep.subr.bf16.mxu0 0
    %99 = vmatpush1.bf16.msra.mxu0 0
    %100 = vmatprep.subr.bf16.mxu0 0
    %101 = vmatpush1.bf16.msra.mxu0 0
    %102 = vmatprep.subr.bf16.mxu0 0
    %103 = vmatpush1.bf16.msra.mxu0 0
    %104 = vmatprep.subr.bf16.mxu0 0
    %105 = vmatpush1.bf16.msra.mxu0 0
    %106 = vmatprep.mubr.bf16.mxu0 0
    %107 = vmatmul.mubr.bf16.gmra.mrb[0].mxu0 %v72
    %v108 = vpop.f32.mrb[0].mxu0
    %v109 = vadd.f32 %v56, %v108
    %v110 = vpop.f32.mrb[0].mxu0
    %v111 = vpop.f32.mrb[0].mxu0
    %v112 = vadd.f32 %v56, %v111
    %v113 = vpop.f32.mrb[0].mxu0
    %114 = vdwg.mxu0
    %v115 = vpack.c.bf16 %v112, %v109
    %v117 = vunpack.c.l.b16 %v115
    %v118 = vunpack.c.h.b16 %v115
    %v119 = vpack.c.b16 %v117, %v117
    %v120 = vpack.c.b16 %v118, %v118
    %vm123 = vcmask 257024
    %124 = vst.msk [vmem:[#allocation7] sm:$0xf] %vm123, %v119
    %125 = vst.msk [vmem:[#allocation7 + $0x4] sm:$0xf] %vm123, %v120
    // Predicated region
    $region22: #{tpu_custom_call.1} parent=1 // pred_check
      _
    $region23: #{tpu_custom_call.1} parent=1 // pred_check_branch
      %127 = sbr.rel (0) target = $region25
    $region24: #{tpu_custom_call.1} parent=1 // pred_region
      %s129 = ssub.s32 128, 128
      %130 = vsyncadd [#allocation4], %s129
      %s131 = sshll.u32 [#allocation7], 4
      %s132 = int_to_ptr.vmem [resolvable:$true] %s131
      %137 = dma.vmem_to_hbm [thread:$0]  %s132, 128, %s3, [#allocation4], 64, 64, 4
    $region25: #{tpu_custom_call.1} parent=1 // pred_fallthru
      _
    // Predicated region
    $region26: #{tpu_custom_call.1} parent=1 // pred_check
      _
    $region27: #{tpu_custom_call.1} parent=1 // pred_check_branch
      %139 = sbr.rel (0) target = $region29
    $region28: #{tpu_custom_call.1} parent=1 // pred_region
      %140 = dma.done [#allocation4], 128
    $region29: #{tpu_custom_call.1} parent=1 // pred_fallthru
      _
    %141 = vsyncpa [#allocation3], 1
    %142 = vsyncpa [#allocation6], 1
    %143 = vsyncpa [#allocation4], 1

</llo_original>
